<compile_context>
chip_gen: v7x
topology: tpu7x:2x2x1
jax: 0.10.0
libtpu: 0.0.40
codegen_flags: <defaults>
</compile_context>

<pallas_src>
import functools

import jax
import jax.numpy as jnp
from jax import lax
from jax.experimental import pallas as pl
from jax.experimental.pallas import tpu as pltpu

_NORM_EPS = 1e-12  # guards rsqrt against all-zero rows (torch would emit NaN)


def _cosine_loss_kernel(o_ref, t_ref, loss_ref, *, root, use_scale, epsilon,
                        n_rows, tile_rows):
    pid = pl.program_id(0)

    @pl.when(pid == 0)
    def _init():
        loss_ref[...] = jnp.zeros_like(loss_ref)

    o = o_ref[...].astype(jnp.float32)               # [TILE_ROWS, D]
    t = t_ref[...].astype(jnp.float32)

    # Row-wise lane reductions (replaces explicit normalization of o and t).
    oo = jnp.sum(o * o, axis=-1, keepdims=True)      # [TILE_ROWS, 1]
    tt = jnp.sum(t * t, axis=-1, keepdims=True)
    ot = jnp.sum(o * t, axis=-1, keepdims=True)

    inv_o_norm = lax.rsqrt(oo + _NORM_EPS)
    inv_t_norm = lax.rsqrt(tt + _NORM_EPS)

    cos = ot * inv_o_norm * inv_t_norm
    cosine_diffs = (1.0 - cos) * 0.5

    # nth_root(x) = (x + eps) ** (1/root); specialize the default root == 2.
    if root == 2:
        per_row = jnp.sqrt(cosine_diffs + epsilon)
    else:
        per_row = (cosine_diffs + epsilon) ** (1.0 / root)

    if use_scale:
        o_norm = oo * inv_o_norm                     # = sqrt(oo)
        t_norm = tt * inv_t_norm                     # = sqrt(tt)
        scale_diff = 1.0 + jnp.abs(t_norm - o_norm) * inv_t_norm
        per_row = scale_diff * per_row

    # Mask rows past the true batch size (last grid step may be partial).
    row_ids = pid * tile_rows + lax.broadcasted_iota(jnp.int32, per_row.shape, 0)
    per_row = jnp.where(row_ids < n_rows, per_row, 0.0)

    loss_ref[...] += jnp.sum(per_row, axis=0, keepdims=True)

    @pl.when(pid == pl.num_programs(0) - 1)
    def _finalize():
        loss_ref[...] = loss_ref[...] * (1.0 / n_rows)


def cosine_loss(output, y_target, *, root=2, use_scale=False, epsilon=1e-07,
                tile_rows=None, vmem_limit_bytes=None):
    """Pallas implementation of CosineLoss.forward for 2-D [N, D] inputs."""
    assert output.shape == y_target.shape and output.ndim == 2
    N, D = output.shape
    itemsize = jnp.dtype(output.dtype).itemsize

    if tile_rows is None:
        # 2 inputs x 2 pipeline buffers x tile_rows x D x itemsize; keep the
        # working set around ~8 MiB so it fits every generation's default
        # scoped VMEM (16 MiB on v5e) with headroom.
        budget = 8 * 1024 * 1024
        max_rows = max(8, budget // (4 * D * itemsize))
        tile_rows = min(N, 512, max_rows)
    tile_rows = min(tile_rows, N)
    if tile_rows < N:
        tile_rows = max(8, (tile_rows // 8) * 8)     # sublane-aligned tiles

    grid = (pl.cdiv(N, tile_rows),)

    kernel = functools.partial(
        _cosine_loss_kernel, root=root, use_scale=use_scale, epsilon=epsilon,
        n_rows=N, tile_rows=tile_rows)

    # TODO(synk): on v7x, split the batch axis into a leading "parallel"
    # super-block axis with per-block partial sums so both TensorCores share
    # this bandwidth-bound reduction; and lane-pad D to a multiple of 128 when
    # D < 128 for full VPU/DMA utilization.
    loss = pl.pallas_call(
        kernel,
        out_shape=jax.ShapeDtypeStruct((1, 1), jnp.float32),
        grid_spec=pltpu.PrefetchScalarGridSpec(
            num_scalar_prefetch=0,
            grid=grid,
            in_specs=[
                pl.BlockSpec((tile_rows, D), lambda i: (i, 0)),
                pl.BlockSpec((tile_rows, D), lambda i: (i, 0)),
            ],
            out_specs=pl.BlockSpec((1, 1), lambda i: (0, 0)),
        ),
        compiler_params=pltpu.CompilerParams(
            dimension_semantics=("arbitrary",),
            vmem_limit_bytes=vmem_limit_bytes,
        ),
    )(output, y_target)

    return loss[0, 0]


def _cosine_loss_ref(output, y_target, *, root=2, use_scale=False,
                     epsilon=1e-07):
    """Pure-JAX reference mirroring the torch module (for a sanity check)."""
    o = output.astype(jnp.float32)
    t = y_target.astype(jnp.float32)
    o_n = jnp.linalg.norm(o, axis=-1)
    t_n = jnp.linalg.norm(t, axis=-1)
    cos = jnp.sum((o / o_n[:, None]) * (t / t_n[:, None]), axis=-1)
    cosine_diffs = (1.0 - cos) / 2.0
    exp_loss = (cosine_diffs + epsilon) ** (1.0 / root)
    if use_scale:
        exp_loss = (1.0 + jnp.abs(t_n - o_n) / t_n) * exp_loss
    return jnp.mean(exp_loss)


if __name__ == "__main__":
    key = jax.random.PRNGKey(0)
    k1, k2, k3, k4 = jax.random.split(key, 4)

    # Shapes consistent with the module's forward: [batch, hidden].
    output = jax.random.normal(k1, (8, 32), dtype=jnp.float32)
    y_target = jax.random.normal(k2, (8, 32), dtype=jnp.float32)

    loss = jax.block_until_ready(cosine_loss(output, y_target))
    loss_scaled = jax.block_until_ready(
        cosine_loss(output, y_target, root=2, use_scale=True))

    # Exercise the multi-step grid with a partial last tile and root != 2.
    out2 = jax.random.normal(k3, (20, 32), dtype=jnp.float32)
    tgt2 = jax.random.normal(k4, (20, 32), dtype=jnp.float32)
    loss_tiled = jax.block_until_ready(
        cosine_loss(out2, tgt2, root=3, use_scale=True, tile_rows=8))

    ok = True
    ok &= bool(jnp.allclose(loss, _cosine_loss_ref(output, y_target),
                            rtol=1e-3, atol=1e-5))
    ok &= bool(jnp.allclose(
        loss_scaled, _cosine_loss_ref(output, y_target, use_scale=True),
        rtol=1e-3, atol=1e-5))
    ok &= bool(jnp.allclose(
        loss_tiled, _cosine_loss_ref(out2, tgt2, root=3, use_scale=True),
        rtol=1e-3, atol=1e-5))

    if ok:
        print("KERNEL_OK")
    else:
        print("KERNEL_MISMATCH")
</pallas_src>

<mosaic_0001>
module attributes {stable_mosaic.version = 11 : i64} {
  func.func @_cosine_loss_kernel(%arg0: i32, %arg1: memref<8x32xf32, #tpu.memory_space<vmem>>, %arg2: memref<8x32xf32, #tpu.memory_space<vmem>>, %arg3: memref<1x1xf32, #tpu.memory_space<vmem>>) attributes {dimension_semantics = [#tpu.dimension_semantics<arbitrary>], iteration_bounds = array<i64: 1>, scalar_prefetch = 0 : i64, scratch_operands = 0 : i64, tpu.core_type = #tpu.core_type<tc>, window_params = [{transform_indices = @transform_0, window_bounds = array<i64: 8, 32>}, {transform_indices = @transform_1, window_bounds = array<i64: 8, 32>}, {pipeline_mode = #tpu.pipeline_mode<synchronous>, transform_indices = @transform_2, window_bounds = array<i64: 1, 1>}]} {
    %c0_i32 = arith.constant 0 : i32
    %0 = arith.cmpi eq, %arg0, %c0_i32 : i32
    %1 = arith.extui %0 : i1 to i32
    %c0_i32_0 = arith.constant 0 : i32
    %2 = arith.cmpi ne, %1, %c0_i32_0 : i32
    scf.if %2 {
      %cst_20 = arith.constant 0.000000e+00 : f32
      %45 = vector.broadcast %cst_20 : f32 to vector<1x1xf32>
      %c0_21 = arith.constant 0 : index
      %c0_22 = arith.constant 0 : index
      %46 = vector.load %arg3[%c0_21, %c0_22] : memref<1x1xf32, #tpu.memory_space<vmem>>, vector<1x1xf32>
      tpu.vector_store %arg3[%c0_21, %c0_22], %45 {strides = array<i32>} : memref<1x1xf32, #tpu.memory_space<vmem>>, vector<1x1xf32>,
    } else {
    }
    %c0 = arith.constant 0 : index
    %c0_1 = arith.constant 0 : index
    %3 = vector.load %arg1[%c0, %c0_1] : memref<8x32xf32, #tpu.memory_space<vmem>>, vector<8x32xf32>
    %c0_2 = arith.constant 0 : index
    %c0_3 = arith.constant 0 : index
    %4 = vector.load %arg2[%c0_2, %c0_3] : memref<8x32xf32, #tpu.memory_space<vmem>>, vector<8x32xf32>
    %5 = arith.mulf %3, %3 : vector<8x32xf32>
    %cst = arith.constant dense<0.000000e+00> : vector<8xf32>
    %6 = vector.multi_reduction <add>, %5, %cst [1] : vector<8x32xf32> to vector<8xf32>
    %7 = vector.shape_cast %6 : vector<8xf32> to vector<8x1xf32>
    %8 = arith.mulf %4, %4 : vector<8x32xf32>
    %cst_4 = arith.constant dense<0.000000e+00> : vector<8xf32>
    %9 = vector.multi_reduction <add>, %8, %cst_4 [1] : vector<8x32xf32> to vector<8xf32>
    %10 = vector.shape_cast %9 : vector<8xf32> to vector<8x1xf32>
    %11 = arith.mulf %3, %4 : vector<8x32xf32>
    %cst_5 = arith.constant dense<0.000000e+00> : vector<8xf32>
    %12 = vector.multi_reduction <add>, %11, %cst_5 [1] : vector<8x32xf32> to vector<8xf32>
    %13 = vector.shape_cast %12 : vector<8xf32> to vector<8x1xf32>
    %cst_6 = arith.constant 9.99999996E-13 : f32
    %14 = vector.broadcast %cst_6 : f32 to vector<8x1xf32>
    %15 = arith.addf %7, %14 : vector<8x1xf32>
    %16 = math.rsqrt %15 : vector<8x1xf32>
    %cst_7 = arith.constant 9.99999996E-13 : f32
    %17 = vector.broadcast %cst_7 : f32 to vector<8x1xf32>
    %18 = arith.addf %10, %17 : vector<8x1xf32>
    %19 = math.rsqrt %18 : vector<8x1xf32>
    %20 = arith.mulf %13, %16 : vector<8x1xf32>
    %21 = arith.mulf %20, %19 : vector<8x1xf32>
    %cst_8 = arith.constant 1.000000e+00 : f32
    %22 = vector.broadcast %cst_8 : f32 to vector<8x1xf32>
    %23 = arith.subf %22, %21 : vector<8x1xf32>
    %cst_9 = arith.constant 5.000000e-01 : f32
    %24 = vector.broadcast %cst_9 : f32 to vector<8x1xf32>
    %25 = arith.mulf %23, %24 : vector<8x1xf32>
    %cst_10 = arith.constant 1.000000e-07 : f32
    %26 = vector.broadcast %cst_10 : f32 to vector<8x1xf32>
    %27 = arith.addf %25, %26 : vector<8x1xf32>
    %28 = math.sqrt %27 : vector<8x1xf32>
    %c8_i32 = arith.constant 8 : i32
    %29 = arith.muli %arg0, %c8_i32 : i32
    %30 = tpu.iota {dimensions = array<i32: 0>} : vector<8x1xi32>
    %31 = vector.broadcast %29 : i32 to vector<8x1xi32>
    %32 = arith.addi %31, %30 : vector<8x1xi32>
    %c8_i32_11 = arith.constant 8 : i32
    %33 = vector.broadcast %c8_i32_11 : i32 to vector<8x1xi32>
    %34 = arith.cmpi slt, %32, %33 : vector<8x1xi32>
    %cst_12 = arith.constant 0.000000e+00 : f32
    %35 = vector.broadcast %cst_12 : f32 to vector<8x1xf32>
    %36 = arith.select %34, %28, %35 : vector<8x1xi1>, vector<8x1xf32>
    %c0_13 = arith.constant 0 : index
    %c0_14 = arith.constant 0 : index
    %37 = vector.load %arg3[%c0_13, %c0_14] : memref<1x1xf32, #tpu.memory_space<vmem>>, vector<1x1xf32>
    %cst_15 = arith.constant dense<0.000000e+00> : vector<1xf32>
    %38 = vector.multi_reduction <add>, %36, %cst_15 [0] : vector<8x1xf32> to vector<1xf32>
    %39 = vector.shape_cast %38 : vector<1xf32> to vector<1x1xf32>
    %40 = arith.addf %37, %39 : vector<1x1xf32>
    %c0_16 = arith.constant 0 : index
    %c0_17 = arith.constant 0 : index
    %41 = vector.load %arg3[%c0_16, %c0_17] : memref<1x1xf32, #tpu.memory_space<vmem>>, vector<1x1xf32>
    tpu.vector_store %arg3[%c0_16, %c0_17], %40 {strides = array<i32>} : memref<1x1xf32, #tpu.memory_space<vmem>>, vector<1x1xf32>,
    %c0_i32_18 = arith.constant 0 : i32
    %42 = arith.cmpi eq, %arg0, %c0_i32_18 : i32
    %43 = arith.extui %42 : i1 to i32
    %c0_i32_19 = arith.constant 0 : i32
    %44 = arith.cmpi ne, %43, %c0_i32_19 : i32
    scf.if %44 {
      %c0_20 = arith.constant 0 : index
      %c0_21 = arith.constant 0 : index
      %45 = vector.load %arg3[%c0_20, %c0_21] : memref<1x1xf32, #tpu.memory_space<vmem>>, vector<1x1xf32>
      %cst_22 = arith.constant 1.250000e-01 : f32
      %46 = vector.broadcast %cst_22 : f32 to vector<1x1xf32>
      %47 = arith.mulf %45, %46 : vector<1x1xf32>
      %c0_23 = arith.constant 0 : index
      %c0_24 = arith.constant 0 : index
      %48 = vector.load %arg3[%c0_23, %c0_24] : memref<1x1xf32, #tpu.memory_space<vmem>>, vector<1x1xf32>
      tpu.vector_store %arg3[%c0_23, %c0_24], %47 {strides = array<i32>} : memref<1x1xf32, #tpu.memory_space<vmem>>, vector<1x1xf32>,
    } else {
    }
    return
  }
  func.func @transform_0(%arg0: i32) -> (i32, i32) {
    %c0_i32 = arith.constant 0 : i32
    %c0_i32_0 = arith.constant 0 : i32
    return %arg0, %c0_i32 : i32, i32
  }
  func.func @transform_1(%arg0: i32) -> (i32, i32) {
    %c0_i32 = arith.constant 0 : i32
    %c0_i32_0 = arith.constant 0 : i32
    return %arg0, %c0_i32 : i32, i32
  }
  func.func @transform_2(%arg0: i32) -> (i32, i32) {
    %c0_i32 = arith.constant 0 : i32
    %c0_i32_0 = arith.constant 0 : i32
    %c0_i32_1 = arith.constant 0 : i32
    return %c0_i32, %c0_i32_0 : i32, i32
  }
}

</mosaic_0001>

<llo_original>
// kernel: tpu_custom_call.1
$region0: #{tpu_custom_call.1}
  #allocation0 [shape = 'u32[]', space=smem, size = 0x4, offset = 0x4, fixed_abs, tag = 'smem constant byte address 0x4 - core index']
  #allocation1 [shape = 'u32[144,128]{1,0:T(1,128)}', space=vmem, size = 0x12000, scoped, tag = 'internal scratch']
  %s0 = inlined_call_operand.hbm [shape: f32[8,32], index: 0, kind: input, shape index: {}]
  %s1 = inlined_call_operand.hbm [shape: f32[8,32], index: 1, kind: input, shape index: {}]
  %s2 = inlined_call_operand.hbm [shape: f32[1,1], index: 2, kind: output, shape index: {}]
  %s3 = sld [smem:[#allocation0]]
  $region34: #{tpu_custom_call.1} parent=0
    _
  %s5 = ssub.s32 1, %s3
  %s6 = scalar_select 0, %s5, %s3
  $region1: #{tpu_custom_call.1} parent=0
    #allocation2 [shape = 'u8[4096]{0}', space=vmem, size = 0x1000, scoped, tag = 'input window, operand 0, single buffered']
    #allocation3 [shape = 's32[1]{0}', space=sflag, size = 0x4, scoped, tag = 'scoped memory for tpu_custom_call.1']
    #allocation4 [shape = 's32[1]{0}', space=sflag, size = 0x4, scoped, tag = 'scoped memory for tpu_custom_call.1']
    #allocation5 [shape = 'u8[4096]{0}', space=vmem, size = 0x1000, scoped, tag = 'input window, operand 1, single buffered']
    #allocation6 [shape = 's32[1]{0}', space=sflag, size = 0x4, scoped, tag = 'scoped memory for tpu_custom_call.1']
    #allocation7 [shape = 'u8[512]{0}', space=vmem, size = 0x400, scoped, tag = 'output window, operand 0, single buffered']
    %7 = vsyncpa [#allocation3], 0
    %8 = vsyncpa [#allocation6], 0
    %9 = vsyncpa [#allocation4], 0
    // Predicated region
    $region2: #{tpu_custom_call.1} parent=1 // pred_check
      _
    $region3: #{tpu_custom_call.1} parent=1 // pred_check_branch
      %11 = sbr.rel (0) target = $region5
    $region4: #{tpu_custom_call.1} parent=1 // pred_region
      %s13 = ssub.s32 128, 128
      %14 = vsyncadd [#allocation3], %s13
      %s16 = sshll.u32 [#allocation2], 4
      %s17 = int_to_ptr.vmem [resolvable:$true] %s16
      %19 = dma.hbm_to_vmem [thread:$0]  %s0, 128, %s17, [#allocation3]
    $region5: #{tpu_custom_call.1} parent=1 // pred_fallthru
      _
    // Predicated region
    $region6: #{tpu_custom_call.1} parent=1 // pred_check
      _
    $region7: #{tpu_custom_call.1} parent=1 // pred_check_branch
      %21 = sbr.rel (0) target = $region9
    $region8: #{tpu_custom_call.1} parent=1 // pred_region
      %s23 = ssub.s32 128, 128
      %24 = vsyncadd [#allocation6], %s23
      %s26 = sshll.u32 [#allocation5], 4
      %s27 = int_to_ptr.vmem [resolvable:$true] %s26
      %29 = dma.hbm_to_vmem [thread:$0]  %s1, 128, %s27, [#allocation6]
    $region9: #{tpu_custom_call.1} parent=1 // pred_fallthru
      _
    // Predicated region
    $region10: #{tpu_custom_call.1} parent=1 // pred_check
      _
    $region11: #{tpu_custom_call.1} parent=1 // pred_check_branch
      %31 = sbr.rel (0) target = $region13
    $region12: #{tpu_custom_call.1} parent=1 // pred_region
      %32 = dma.done [#allocation3], 128
    $region13: #{tpu_custom_call.1} parent=1 // pred_fallthru
      _
    // Predicated region
    $region14: #{tpu_custom_call.1} parent=1 // pred_check
      _
    $region15: #{tpu_custom_call.1} parent=1 // pred_check_branch
      %34 = sbr.rel (0) target = $region17
    $region16: #{tpu_custom_call.1} parent=1 // pred_region
      %35 = dma.done [#allocation6], 128
    $region17: #{tpu_custom_call.1} parent=1 // pred_fallthru
      _
    %p36 = scmp.eq.s32.totalorder 0, 0
    // Predicated region
    $region18: #{tpu_custom_call.1} parent=1 // pred_check
      %p37 = pneg %p36
    $region19: #{tpu_custom_call.1} parent=1 // pred_check_branch
      %39 = sbr.rel (%p37) target = $region21
    $region20: #{tpu_custom_call.1} parent=1 // pred_region
      %vm40 = vcmask 0
      %41 = vst.msk [vmem:[#allocation7] sm:$0x1] %vm40, 0.0
    $region21: #{tpu_custom_call.1} parent=1 // pred_fallthru
      _
    %v42 = vld [vmem:[#allocation2] sm:$0xff]
    %v43 = vld [vmem:[#allocation5] sm:$0xff]
    %v44 = vmul.f32 %v42, %v42
    %vm45 = vcmask 261120
    %v46 = vsel %vm45, %v44, 0.0
    %47 = vadd.xlane.f32.xlu0 %v46
    %v48 = vpop.xlane.xlu0 %47
    %v49 = vmul.f32 %v43, %v43
    %v50 = vsel %vm45, %v49, 0.0
    %51 = vadd.xlane.f32.xlu0 %v50
    %v52 = vpop.xlane.xlu0 %51
    %v53 = vmul.f32 %v42, %v43
    %v54 = vsel %vm45, %v53, 0.0
    %55 = vadd.xlane.f32.xlu0 %v54
    %v56 = vpop.xlane.xlu0 %55
    %v57 = vadd.f32 %v48, 1e-12
    %v58 = vrsqrt.pop %v57
    %v59 = vadd.f32 %v52, 1e-12
    %v60 = vrsqrt.pop %v59
    %v61 = vmul.f32 %v56, %v58
    %v62 = vmul.f32 %v61, %v60
    %v63 = vsub.f32 1.0, %v62
    %v64 = vmul.f32 %v63, 0.5
    %v65 = vadd.f32 %v64, 1e-07
    %v66 = vrsqrt.pop %v65
    %v67 = vmul.f32 %v65, %v66
    %vm68 = vcmp.eq.f32.partialorder %v65, inf
    %v69 = vsel %vm68, %v65, %v67
    %vm70 = vcmp.eq.f32.partialorder %v65, 0.0
    %v71 = vand.u32 %v65, 2147483648
    %v72 = vsel %vm70, %v71, %v69
    %s73 = smul.u32 0, 8
    %v74 = vlaneseq
    %v75 = vshrl.u32 %v74, 7
    %v76 = vstv %s73
    %v77 = vadd.s32 %v76, %v75
    %vm78 = vcmp.lt.s32.totalorder %v77, 8
    %v79 = vsel %vm78, %v72, 0.0
    %v80 = vld [vmem:[#allocation7] sm:$0x1]
    %v81 = vrot.slane %v79, 4
    %v82 = vadd.f32 %v79, %v81
    %v83 = vrot.slane %v82, 2
    %v84 = vadd.f32 %v82, %v83
    %v85 = vrot.slane %v84, 1
    %v86 = vadd.f32 %v84, %v85
    %v87 = vadd.f32 %v80, %v86
    %vm88 = vcmask 0
    %89 = vst.msk [vmem:[#allocation7] sm:$0x1] %vm88, %v87
    // Predicated region
    $region22: #{tpu_custom_call.1} parent=1 // pred_check
      %p90 = pneg %p36
    $region23: #{tpu_custom_call.1} parent=1 // pred_check_branch
      %92 = sbr.rel (%p90) target = $region25
    $region24: #{tpu_custom_call.1} parent=1 // pred_region
      %v93 = vld [vmem:[#allocation7] sm:$0x1]
      %v94 = vmul.f32 %v93, 0.125
      %95 = vst.msk [vmem:[#allocation7] sm:$0x1] %vm88, %v94
    $region25: #{tpu_custom_call.1} parent=1 // pred_fallthru
      _
    // Predicated region
    $region26: #{tpu_custom_call.1} parent=1 // pred_check
      _
    $region27: #{tpu_custom_call.1} parent=1 // pred_check_branch
      %97 = sbr.rel (0) target = $region29
    $region28: #{tpu_custom_call.1} parent=1 // pred_region
      %s99 = ssub.s32 16, 16
      %100 = vsyncadd [#allocation4], %s99
      %s102 = sshll.u32 [#allocation7], 4
      %s103 = int_to_ptr.vmem [resolvable:$true] %s102
      %105 = dma.vmem_to_hbm [thread:$0]  %s103, 16, %s2, [#allocation4]
    $region29: #{tpu_custom_call.1} parent=1 // pred_fallthru
      _
    // Predicated region
    $region30: #{tpu_custom_call.1} parent=1 // pred_check
      _
    $region31: #{tpu_custom_call.1} parent=1 // pred_check_branch
      %107 = sbr.rel (0) target = $region33
    $region32: #{tpu_custom_call.1} parent=1 // pred_region
      %108 = dma.done [#allocation4], 16
    $region33: #{tpu_custom_call.1} parent=1 // pred_fallthru
      _
    %109 = vsyncpa [#allocation3], 1
    %110 = vsyncpa [#allocation6], 1
    %111 = vsyncpa [#allocation4], 1

</llo_original>
